<compile_context>
chip_gen: v7x
topology: tpu7x:2x2x1
jax: 0.10.0
libtpu: 0.0.40
codegen_flags: <defaults>
</compile_context>

<pallas_src>
import math
from functools import partial

import jax
import jax.numpy as jnp
from jax import lax
from jax.experimental import pallas as pl
from jax.experimental.pallas import tpu as pltpu

F0 = 0.025                    # cfg.base_freq (deterministic, set in-script)
LANE = 128
SUBLANE = 8
ROW_TILE = 4096               # streaming block rows: 4096x128 f32 = 2 MiB / input
CHUNK = 256                   # inner-loop rows per chunk (32 vregs f32 / input)
SINGLE_BLOCK_MAX_ROWS = ROW_TILE   # <= one block -> single-shot path


def _round_up(x: int, n: int) -> int:
    return ((x + n - 1) // n) * n


def _pad_to_slab(x: jax.Array, m_rows: int) -> jax.Array:
    """Flatten, zero-pad to m_rows*128 elements, reshape to (m_rows, 128)."""
    flat = x.reshape(-1)
    pad = m_rows * LANE - flat.shape[0]
    if pad:
        flat = jnp.pad(flat, (0, pad))
    return flat.reshape(m_rows, LANE)


# ---------------------------------------------------------------------------
# Small-input path: whole slab as one block, no accumulator / no pl.when.
# ---------------------------------------------------------------------------
def _exp_loss_single_kernel(p_ref, t_ref, o_ref, *, zf, n_elem, inv_count):
    m = p_ref.shape[0]
    row_iota = lax.broadcasted_iota(jnp.int32, (m, LANE), 0)
    lane_iota = lax.broadcasted_iota(jnp.int32, (m, LANE), 1)
    valid = row_iota * LANE + lane_iota < n_elem
    # Mask on the INPUTS before log2: padded lanes become log2(1)-log2(1) == 0.
    pf = jnp.where(valid, p_ref[...].astype(jnp.float32) + zf, 1.0)
    tf = jnp.where(valid, t_ref[...].astype(jnp.float32) + zf, 1.0)
    ptr = jnp.abs(jnp.log2(pf) - jnp.log2(tf))
    o_ref[...] = (jnp.sum(ptr) * inv_count).reshape(1, 1)


# ---------------------------------------------------------------------------
# Streaming path: (8,128) vector accumulator, big blocks, in-kernel tail mask,
# in-kernel finalize (cross-lane reduce + scale).
# ---------------------------------------------------------------------------
def _exp_loss_stream_kernel(p_ref, t_ref, o_ref, acc_ref, *, zf, n_elem, inv_count):
    step = pl.program_id(0)

    @pl.when(step == 0)
    def _init():
        acc_ref[...] = jnp.zeros_like(acc_ref)

    base_row = step * ROW_TILE
    row_iota = lax.broadcasted_iota(jnp.int32, (CHUNK, LANE), 0)
    lane_iota = lax.broadcasted_iota(jnp.int32, (CHUNK, LANE), 1)

    def chunk_body(c, carry):
        r0 = pl.multiple_of(c * CHUNK, CHUNK)
        p = p_ref[pl.ds(r0, CHUNK), :].astype(jnp.float32)
        t = t_ref[pl.ds(r0, CHUNK), :].astype(jnp.float32)
        # Global flat element index; anything at/after n_elem (zero-pad tail or
        # garbage rows of the ragged last block) is replaced by 1.0 BEFORE the
        # log2, so it contributes exactly 0 to the sum.
        idx = (base_row + r0 + row_iota) * LANE + lane_iota
        valid = idx < n_elem
        pf = jnp.where(valid, p + zf, 1.0)
        tf = jnp.where(valid, t + zf, 1.0)
        ptr = jnp.abs(jnp.log2(pf) - jnp.log2(tf))
        # Fold (CHUNK,128) -> (8,128) with plain vreg adds (VPU only, no XLU).
        return carry + ptr.reshape(CHUNK // SUBLANE, SUBLANE, LANE).sum(axis=0)

    block_sum = lax.fori_loop(
        0, ROW_TILE // CHUNK, chunk_body,
        jnp.zeros((SUBLANE, LANE), jnp.float32), unroll=True)
    acc_ref[...] += block_sum

    @pl.when(step == pl.num_programs(0) - 1)
    def _finalize():
        o_ref[...] = (jnp.sum(acc_ref[...]) * inv_count).reshape(1, 1)


def exp_loss(product: jax.Array, target: jax.Array, f0: float = F0) -> jax.Array:
    assert product.shape == target.shape, "product/target must have the same shape"
    n_elem = math.prod(product.shape)
    zf = float(f0) * 1.01
    inv_count = 1.0 / float(n_elem)
    rows = pl.cdiv(n_elem, LANE)

    if rows <= SINGLE_BLOCK_MAX_ROWS:
        m = _round_up(max(rows, SUBLANE), SUBLANE)
        p2 = _pad_to_slab(product, m)
        t2 = _pad_to_slab(target, m)
        out = pl.pallas_call(
            partial(_exp_loss_single_kernel, zf=zf, n_elem=n_elem, inv_count=inv_count),
            out_shape=jax.ShapeDtypeStruct((1, 1), jnp.float32),
            grid_spec=pltpu.PrefetchScalarGridSpec(
                num_scalar_prefetch=0,
                grid=(1,),
                in_specs=[
                    pl.BlockSpec((m, LANE), lambda i: (0, 0)),
                    pl.BlockSpec((m, LANE), lambda i: (0, 0)),
                ],
                out_specs=pl.BlockSpec((1, 1), lambda i: (0, 0)),
            ),
            compiler_params=pltpu.CompilerParams(
                dimension_semantics=("arbitrary",),
            ),
        )(p2, t2)
        return out[0, 0]

    # Streaming path: rows > ROW_TILE, pad flat size only up to the next
    # multiple of 128 (<= 127 elements); the ragged last grid block is masked
    # inside the kernel, so no big alignment pad / copy is needed.
    p2 = _pad_to_slab(product, rows)
    t2 = _pad_to_slab(target, rows)
    num_steps = pl.cdiv(rows, ROW_TILE)
    out = pl.pallas_call(
        partial(_exp_loss_stream_kernel, zf=zf, n_elem=n_elem, inv_count=inv_count),
        out_shape=jax.ShapeDtypeStruct((1, 1), jnp.float32),
        grid_spec=pltpu.PrefetchScalarGridSpec(
            num_scalar_prefetch=0,
            grid=(num_steps,),
            in_specs=[
                pl.BlockSpec((ROW_TILE, LANE), lambda i: (i, 0)),
                pl.BlockSpec((ROW_TILE, LANE), lambda i: (i, 0)),
            ],
            out_specs=pl.BlockSpec((1, 1), lambda i: (0, 0)),
            scratch_shapes=[pltpu.VMEM((SUBLANE, LANE), jnp.float32)],
        ),
        compiler_params=pltpu.CompilerParams(
            dimension_semantics=("arbitrary",),
        ),
    )(p2, t2)
    return out[0, 0]


def exp_loss_ref(product, target, f0: float = F0):
    zf = f0 * 1.01
    return jnp.mean(jnp.abs(jnp.log2((product + zf) / (target + zf))))


if __name__ == "__main__":
    key = jax.random.PRNGKey(0)

    def _check(shape, key, rtol):
        kp, kt, key = jax.random.split(key, 3)
        # positive "frequencies" so the log argument is positive, as the module expects
        product = jax.random.uniform(kp, shape, jnp.float32, minval=0.01, maxval=1.0)
        target = jax.random.uniform(kt, shape, jnp.float32, minval=0.01, maxval=1.0)
        out = exp_loss(product, target)
        jax.block_until_ready(out)
        ref = exp_loss_ref(product, target)
        assert jnp.allclose(out, ref, rtol=rtol, atol=1e-6), (shape, out, ref)
        return key

    # 1) Small NCHW-like shape from the spec -> single-block path.
    key = _check((2, 4, 16, 16), key, 1e-5)
    # 2) Non-128-aligned medium shape -> single-block path with in-kernel mask.
    key = _check((3, 5, 131, 181), key, 2e-5)
    # 3) Larger ragged shape -> streaming path (2 grid steps, masked last block).
    key = _check((3, 7, 223, 191), key, 1e-4)

    print("KERNEL_OK")
</pallas_src>

<mosaic_0001>
module attributes {stable_mosaic.version = 11 : i64} {
  func.func @_exp_loss_single_kernel(%arg0: i32, %arg1: memref<16x128xf32, #tpu.memory_space<vmem>>, %arg2: memref<16x128xf32, #tpu.memory_space<vmem>>, %arg3: memref<1x1xf32, #tpu.memory_space<vmem>>) attributes {dimension_semantics = [#tpu.dimension_semantics<arbitrary>], iteration_bounds = array<i64: 1>, scalar_prefetch = 0 : i64, scratch_operands = 0 : i64, tpu.core_type = #tpu.core_type<tc>, window_params = [{pipeline_mode = #tpu.pipeline_mode<synchronous>, transform_indices = @transform_0, window_bounds = array<i64: 16, 128>}, {pipeline_mode = #tpu.pipeline_mode<synchronous>, transform_indices = @transform_1, window_bounds = array<i64: 16, 128>}, {pipeline_mode = #tpu.pipeline_mode<synchronous>, transform_indices = @transform_2, window_bounds = array<i64: 1, 1>}]} {
    %0 = tpu.iota {dimensions = array<i32: 0>} : vector<16x128xi32>
    %1 = tpu.iota {dimensions = array<i32: 1>} : vector<16x128xi32>
    %c128_i32 = arith.constant 128 : i32
    %2 = vector.broadcast %c128_i32 : i32 to vector<16x128xi32>
    %3 = arith.muli %0, %2 : vector<16x128xi32>
    %4 = arith.addi %3, %1 : vector<16x128xi32>
    %c2048_i32 = arith.constant 2048 : i32
    %5 = vector.broadcast %c2048_i32 : i32 to vector<16x128xi32>
    %6 = arith.cmpi slt, %4, %5 : vector<16x128xi32>
    %c0 = arith.constant 0 : index
    %c0_0 = arith.constant 0 : index
    %7 = vector.load %arg1[%c0, %c0_0] : memref<16x128xf32, #tpu.memory_space<vmem>>, vector<16x128xf32>
    %cst = arith.constant 2.525000e-02 : f32
    %8 = vector.broadcast %cst : f32 to vector<16x128xf32>
    %9 = arith.addf %7, %8 : vector<16x128xf32>
    %cst_1 = arith.constant 1.000000e+00 : f32
    %10 = vector.broadcast %cst_1 : f32 to vector<16x128xf32>
    %11 = arith.select %6, %9, %10 : vector<16x128xi1>, vector<16x128xf32>
    %c0_2 = arith.constant 0 : index
    %c0_3 = arith.constant 0 : index
    %12 = vector.load %arg2[%c0_2, %c0_3] : memref<16x128xf32, #tpu.memory_space<vmem>>, vector<16x128xf32>
    %cst_4 = arith.constant 2.525000e-02 : f32
    %13 = vector.broadcast %cst_4 : f32 to vector<16x128xf32>
    %14 = arith.addf %12, %13 : vector<16x128xf32>
    %cst_5 = arith.constant 1.000000e+00 : f32
    %15 = vector.broadcast %cst_5 : f32 to vector<16x128xf32>
    %16 = arith.select %6, %14, %15 : vector<16x128xi1>, vector<16x128xf32>
    %17 = math.log %11 : vector<16x128xf32>
    %cst_6 = arith.constant 2.000000e+00 : f32
    %18 = math.log %cst_6 : f32
    %19 = vector.broadcast %18 : f32 to vector<16x128xf32>
    %20 = arith.divf %17, %19 : vector<16x128xf32>
    %21 = math.log %16 : vector<16x128xf32>
    %cst_7 = arith.constant 2.000000e+00 : f32
    %22 = math.log %cst_7 : f32
    %23 = vector.broadcast %22 : f32 to vector<16x128xf32>
    %24 = arith.divf %21, %23 : vector<16x128xf32>
    %25 = arith.subf %20, %24 : vector<16x128xf32>
    %26 = math.absf %25 : vector<16x128xf32>
    %27 = vector.shape_cast %26 : vector<16x128xf32> to vector<1x16x128xf32>
    %cst_8 = arith.constant dense<0.000000e+00> : vector<1xf32>
    %28 = vector.multi_reduction <add>, %27, %cst_8 [1, 2] : vector<1x16x128xf32> to vector<1xf32>
    %29 = vector.shape_cast %28 : vector<1xf32> to vector<1x1x1xf32>
    %30 = vector.extract %29[0, 0, 0] : f32 from vector<1x1x1xf32>
    %cst_9 = arith.constant 4.8828125E-4 : f32
    %31 = arith.mulf %30, %cst_9 : f32
    %32 = vector.broadcast %31 : f32 to vector<1x1xf32>
    %c0_10 = arith.constant 0 : index
    %c0_11 = arith.constant 0 : index
    %33 = vector.load %arg3[%c0_10, %c0_11] : memref<1x1xf32, #tpu.memory_space<vmem>>, vector<1x1xf32>
    tpu.vector_store %arg3[%c0_10, %c0_11], %32 {strides = array<i32>} : memref<1x1xf32, #tpu.memory_space<vmem>>, vector<1x1xf32>,
    return
  }
  func.func @transform_0(%arg0: i32) -> (i32, i32) {
    %c0_i32 = arith.constant 0 : i32
    %c0_i32_0 = arith.constant 0 : i32
    %c0_i32_1 = arith.constant 0 : i32
    return %c0_i32, %c0_i32_0 : i32, i32
  }
  func.func @transform_1(%arg0: i32) -> (i32, i32) {
    %c0_i32 = arith.constant 0 : i32
    %c0_i32_0 = arith.constant 0 : i32
    %c0_i32_1 = arith.constant 0 : i32
    return %c0_i32, %c0_i32_0 : i32, i32
  }
  func.func @transform_2(%arg0: i32) -> (i32, i32) {
    %c0_i32 = arith.constant 0 : i32
    %c0_i32_0 = arith.constant 0 : i32
    %c0_i32_1 = arith.constant 0 : i32
    return %c0_i32, %c0_i32_0 : i32, i32
  }
}

</mosaic_0001>

<llo_original>
// kernel: tpu_custom_call.1
$region0: #{tpu_custom_call.1}
  #allocation0 [shape = 'u32[]', space=smem, size = 0x4, offset = 0x4, fixed_abs, tag = 'smem constant byte address 0x4 - core index']
  #allocation1 [shape = 'u32[144,128]{1,0:T(1,128)}', space=vmem, size = 0x12000, scoped, tag = 'internal scratch']
  %s0 = inlined_call_operand.hbm [shape: f32[16,128], index: 0, kind: input, shape index: {}]
  %s1 = inlined_call_operand.hbm [shape: f32[16,128], index: 1, kind: input, shape index: {}]
  %s2 = inlined_call_operand.hbm [shape: f32[1,1], index: 2, kind: output, shape index: {}]
  %s3 = sld [smem:[#allocation0]]
  $region26: #{tpu_custom_call.1} parent=0
    _
  %s5 = ssub.s32 1, %s3
  %s6 = scalar_select 0, %s5, %s3
  $region1: #{tpu_custom_call.1} parent=0
    #allocation2 [shape = 'u8[8192]{0}', space=vmem, size = 0x2000, scoped, tag = 'input window, operand 0, single buffered']
    #allocation3 [shape = 's32[1]{0}', space=sflag, size = 0x4, scoped, tag = 'scoped memory for tpu_custom_call.1']
    #allocation4 [shape = 's32[1]{0}', space=sflag, size = 0x4, scoped, tag = 'scoped memory for tpu_custom_call.1']
    #allocation5 [shape = 'u8[8192]{0}', space=vmem, size = 0x2000, scoped, tag = 'input window, operand 1, single buffered']
    #allocation6 [shape = 's32[1]{0}', space=sflag, size = 0x4, scoped, tag = 'scoped memory for tpu_custom_call.1']
    #allocation7 [shape = 'u8[512]{0}', space=vmem, size = 0x400, scoped, tag = 'output window, operand 0, single buffered']
    %7 = vsyncpa [#allocation3], 0
    %8 = vsyncpa [#allocation6], 0
    %9 = vsyncpa [#allocation4], 0
    // Predicated region
    $region2: #{tpu_custom_call.1} parent=1 // pred_check
      _
    $region3: #{tpu_custom_call.1} parent=1 // pred_check_branch
      %11 = sbr.rel (0) target = $region5
    $region4: #{tpu_custom_call.1} parent=1 // pred_region
      %s13 = ssub.s32 256, 256
      %14 = vsyncadd [#allocation3], %s13
      %s15 = sshll.u32 [#allocation2], 4
      %s16 = int_to_ptr.vmem [resolvable:$true] %s15
      %21 = dma.hbm_to_vmem [thread:$0]  %s0, 256, %s16, [#allocation3], 128, 128, 8
    $region5: #{tpu_custom_call.1} parent=1 // pred_fallthru
      _
    // Predicated region
    $region6: #{tpu_custom_call.1} parent=1 // pred_check
      _
    $region7: #{tpu_custom_call.1} parent=1 // pred_check_branch
      %23 = sbr.rel (0) target = $region9
    $region8: #{tpu_custom_call.1} parent=1 // pred_region
      %s25 = ssub.s32 256, 256
      %26 = vsyncadd [#allocation6], %s25
      %s27 = sshll.u32 [#allocation5], 4
      %s28 = int_to_ptr.vmem [resolvable:$true] %s27
      %33 = dma.hbm_to_vmem [thread:$0]  %s1, 256, %s28, [#allocation6], 128, 128, 8
    $region9: #{tpu_custom_call.1} parent=1 // pred_fallthru
      _
    // Predicated region
    $region10: #{tpu_custom_call.1} parent=1 // pred_check
      _
    $region11: #{tpu_custom_call.1} parent=1 // pred_check_branch
      %35 = sbr.rel (0) target = $region13
    $region12: #{tpu_custom_call.1} parent=1 // pred_region
      %36 = dma.done [#allocation3], 256
    $region13: #{tpu_custom_call.1} parent=1 // pred_fallthru
      _
    // Predicated region
    $region14: #{tpu_custom_call.1} parent=1 // pred_check
      _
    $region15: #{tpu_custom_call.1} parent=1 // pred_check_branch
      %38 = sbr.rel (0) target = $region17
    $region16: #{tpu_custom_call.1} parent=1 // pred_region
      %39 = dma.done [#allocation6], 256
    $region17: #{tpu_custom_call.1} parent=1 // pred_fallthru
      _
    %v40 = vlaneseq
    %v41 = vshrl.u32 %v40, 7
    %v42 = vadd.s32 %v41, 8
    %v43 = vlaneseq
    %v44 = vand.u32 %v43, 127
    %v45 = vmul.u32 %v41, 128
    %v46 = vmul.u32 %v42, 128
    %v47 = vadd.s32 %v45, %v44
    %v48 = vadd.s32 %v46, %v44
    %vm49 = vcmp.lt.s32.totalorder %v47, 2048
    %vm50 = vcmp.lt.s32.totalorder %v48, 2048
    %v51 = vld [vmem:[#allocation2] sm:$0xff]
    %v52 = vld [vmem:[#allocation2 + $0x8] sm:$0xff]
    %v53 = vadd.f32 %v51, 0.02525
    %v54 = vadd.f32 %v52, 0.02525
    %v55 = vsel %vm49, %v53, 1.0
    %v56 = vsel %vm50, %v54, 1.0
    %v57 = vld [vmem:[#allocation5] sm:$0xff]
    %v58 = vld [vmem:[#allocation5 + $0x8] sm:$0xff]
    %v59 = vadd.f32 %v57, 0.02525
    %v60 = vadd.f32 %v58, 0.02525
    %v61 = vsel %vm49, %v59, 1.0
    %v62 = vsel %vm50, %v60, 1.0
    %v63 = vlog2.pop %v55
    %v64 = vmul.f32 %v63, 0.6931472
    %v65 = vlog2.pop %v56
    %v66 = vmul.f32 %v65, 0.6931472
    %v67 = vrcp.pop 0.6931472
    %v68 = vmul.f32 %v64, %v67
    %v69 = vmul.f32 %v66, %v67
    %v70 = vlog2.pop %v61
    %v71 = vmul.f32 %v70, 0.6931472
    %v72 = vlog2.pop %v62
    %v73 = vmul.f32 %v72, 0.6931472
    %v74 = vmul.f32 %v71, %v67
    %v75 = vmul.f32 %v73, %v67
    %v76 = vsub.f32 %v68, %v74
    %v77 = vsub.f32 %v69, %v75
    %v78 = vand.u32 2147483647, %v76
    %v79 = vand.u32 2147483647, %v77
    %v80 = vadd.f32 %v78, %v79
    %81 = vadd.xlane.f32.xlu0 %v80
    %v82 = vpop.xlane.xlu0 %81
    %v83 = vrot.slane %v82, 4
    %v84 = vadd.f32 %v82, %v83
    %v85 = vrot.slane %v84, 2
    %v86 = vadd.f32 %v84, %v85
    %v87 = vrot.slane %v86, 1
    %v88 = vadd.f32 %v86, %v87
    %s89 = vtos %v88
    %s90 = smul.f32 %s89, 0.00048828125
    %v91 = vstv %s90
    %vm92 = vcmask 0
    %93 = vst.msk [vmem:[#allocation7] sm:$0x1] %vm92, %v91
    // Predicated region
    $region18: #{tpu_custom_call.1} parent=1 // pred_check
      _
    $region19: #{tpu_custom_call.1} parent=1 // pred_check_branch
      %95 = sbr.rel (0) target = $region21
    $region20: #{tpu_custom_call.1} parent=1 // pred_region
      %s97 = ssub.s32 16, 16
      %98 = vsyncadd [#allocation4], %s97
      %s100 = sshll.u32 [#allocation7], 4
      %s101 = int_to_ptr.vmem [resolvable:$true] %s100
      %103 = dma.vmem_to_hbm [thread:$0]  %s101, 16, %s2, [#allocation4]
    $region21: #{tpu_custom_call.1} parent=1 // pred_fallthru
      _
    // Predicated region
    $region22: #{tpu_custom_call.1} parent=1 // pred_check
      _
    $region23: #{tpu_custom_call.1} parent=1 // pred_check_branch
      %105 = sbr.rel (0) target = $region25
    $region24: #{tpu_custom_call.1} parent=1 // pred_region
      %106 = dma.done [#allocation4], 16
    $region25: #{tpu_custom_call.1} parent=1 // pred_fallthru
      _
    %107 = vsyncpa [#allocation3], 1
    %108 = vsyncpa [#allocation6], 1
    %109 = vsyncpa [#allocation4], 1

</llo_original>
